<compile_context>
chip_gen: v7x
topology: tpu7x:2x2x1
jax: 0.10.0
libtpu: 0.0.40
codegen_flags: <defaults>
</compile_context>

<pallas_src>
import math
import functools

import jax
import jax.numpy as jnp
from jax import lax
from jax.experimental import pallas as pl
from jax.experimental.pallas import tpu as pltpu


_NEG_INF = -1e30   # finite: avoids NaN on fully-masked rows (torch gives NaN)


# ----------------------------------------------------------------------------
# Generation-aware VMEM budgeting
# ----------------------------------------------------------------------------
@functools.lru_cache(maxsize=None)
def _vmem_capacity_bytes():
    try:
        return int(pltpu.get_tpu_info().vmem_capacity_bytes)
    except Exception:
        return 64 * 1024 * 1024          # conservative (v7x-sized) fallback


def _vmem_limit_bytes():
    return int(_vmem_capacity_bytes() * 85 // 100)


def _vmem_tile_budget_bytes():
    return int(_vmem_capacity_bytes() * 65 // 100)


# ----------------------------------------------------------------------------
# Weight preparation (call once; cached outside the per-forward path)
# ----------------------------------------------------------------------------
def prepare_params(params, num_heads, compute_dtype=jnp.bfloat16):
    """Transpose torch [out,in] weights, fold 1/sqrt(head_dim) into Wq (in
    f32), cast to the compute dtype, and build a fused QKV weight."""
    d_model = params["wq"].shape[0]
    head_dim = d_model // num_heads
    scale = 1.0 / math.sqrt(head_dim)
    wq_t = (params["wq"].T.astype(jnp.float32) * scale).astype(compute_dtype)
    wk_t = params["wk"].T.astype(compute_dtype)
    wv_t = params["wv"].T.astype(compute_dtype)
    wo_t = params["wo"].T.astype(compute_dtype)
    w_qkv_t = jnp.concatenate([wq_t, wk_t, wv_t], axis=1)   # [d, 3d]
    return {"wq_t": wq_t, "wk_t": wk_t, "wv_t": wv_t, "wo_t": wo_t,
            "w_qkv_t": w_qkv_t, "compute_dtype": compute_dtype,
            "num_heads": num_heads}


# ----------------------------------------------------------------------------
# Kernel 1: tiled dense linear layer  y = x @ w_t   (w_t: [K, N])
# ----------------------------------------------------------------------------
def _linear_kernel_single(x_ref, w_ref, o_ref, *, compute_dtype):
    o_ref[...] = jnp.dot(x_ref[...].astype(compute_dtype), w_ref[...],
                         preferred_element_type=jnp.float32).astype(o_ref.dtype)


def _linear_kernel_inplace(x_ref, w_ref, o_ref, *, compute_dtype):
    # f32 output is resident across the k axis -> accumulate directly into it.
    part = jnp.dot(x_ref[...].astype(compute_dtype), w_ref[...],
                   preferred_element_type=jnp.float32)

    @pl.when(pl.program_id(2) == 0)
    def _():
        o_ref[...] = part

    @pl.when(pl.program_id(2) != 0)
    def _():
        o_ref[...] = o_ref[...] + part


def _linear_kernel_scratch(x_ref, w_ref, o_ref, acc_ref, *, compute_dtype):
    @pl.when(pl.program_id(2) == 0)
    def _():
        acc_ref[...] = jnp.zeros_like(acc_ref)

    acc_ref[...] += jnp.dot(x_ref[...].astype(compute_dtype), w_ref[...],
                            preferred_element_type=jnp.float32)

    @pl.when(pl.program_id(2) == pl.num_programs(2) - 1)
    def _():
        o_ref[...] = acc_ref[...].astype(o_ref.dtype)


def _choose_linear_tiles(M, N, Kd, x_size, w_size, o_size, budget):
    tm_c = [c for c in (512, 256, 128, 64, 32, 16, 8) if M % c == 0] or [M]
    tn_c = [c for c in (512, 256, 128) if N % c == 0] or [N]
    tk_c = [c for c in (1024, 512, 256, 128) if Kd % c == 0] or [Kd]

    def step_bytes(tm, tn, tk):
        # double-buffered in/out blocks + f32 accumulator
        return 2 * (tm * tk * x_size + tk * tn * w_size + tm * tn * o_size) \
               + tm * tn * 4

    for tm in tm_c:
        for tn in tn_c:
            for tk in tk_c:
                if step_bytes(tm, tn, tk) <= budget:
                    return tm, tn, tk
    return tm_c[-1], tn_c[-1], tk_c[-1]


def linear(x, w_t, *, out_dtype=jnp.float32, compute_dtype=jnp.bfloat16):
    """x: [M, K] (any dtype, cast in-kernel), w_t: [K, N] -> [M, N]."""
    M, Kd = x.shape
    N = w_t.shape[1]
    tm, tn, tk = _choose_linear_tiles(
        M, N, Kd,
        jnp.dtype(x.dtype).itemsize, jnp.dtype(w_t.dtype).itemsize,
        jnp.dtype(out_dtype).itemsize, _vmem_tile_budget_bytes())
    grid = (M // tm, N // tn, Kd // tk)

    if grid[2] == 1:
        kernel = functools.partial(_linear_kernel_single,
                                   compute_dtype=compute_dtype)
        scratch = []
    elif jnp.dtype(out_dtype) == jnp.dtype(jnp.float32):
        kernel = functools.partial(_linear_kernel_inplace,
                                   compute_dtype=compute_dtype)
        scratch = []
    else:
        kernel = functools.partial(_linear_kernel_scratch,
                                   compute_dtype=compute_dtype)
        scratch = [pltpu.VMEM((tm, tn), jnp.float32)]

    return pl.pallas_call(
        kernel,
        out_shape=jax.ShapeDtypeStruct((M, N), out_dtype),
        grid=grid,
        in_specs=[
            pl.BlockSpec((tm, tk), lambda i, j, k: (i, k)),
            pl.BlockSpec((tk, tn), lambda i, j, k: (k, j)),
        ],
        out_specs=pl.BlockSpec((tm, tn), lambda i, j, k: (i, j)),
        scratch_shapes=scratch,
        compiler_params=pltpu.CompilerParams(
            dimension_semantics=("parallel", "parallel", "arbitrary"),
            vmem_limit_bytes=_vmem_limit_bytes()),
    )(x, w_t)


# ----------------------------------------------------------------------------
# Kernel 2: per-(batch, q-tile) attention over ALL heads.
#   Q/K/V blocks arrive in the lane-dense [tq|Sk, d_model] layout; heads are
#   static lane slices of width head_dim inside the kernel.
# ----------------------------------------------------------------------------
def _mha_kernel(*refs, num_heads, head_dim, has_mask, mask_per_head,
                is_causal, compute_dtype, exp_dtype, approx_recip):
    if has_mask:
        q_ref, k_ref, v_ref, mask_ref, att_ref, out_ref = refs
    else:
        q_ref, k_ref, v_ref, att_ref, out_ref = refs
        mask_ref = None

    tq = q_ref.shape[1]
    Sk = k_ref.shape[1]

    if is_causal:
        q0 = pl.program_id(1) * tq
        rows = q0 + lax.broadcasted_iota(jnp.int32, (tq, Sk), 0)
        cols = lax.broadcasted_iota(jnp.int32, (tq, Sk), 1)
        future = cols > rows                              # [tq, Sk] bool

    for h in range(num_heads):                # static, small trip count
        lo = h * head_dim
        q_h = q_ref[0, :, lo:lo + head_dim]   # [tq, hd] (scale folded in Wq)
        k_h = k_ref[0, :, lo:lo + head_dim]   # [Sk, hd]
        v_h = v_ref[0, :, lo:lo + head_dim]   # [Sk, hd]

        # scores = q @ k^T without an explicit transpose / relayout.
        scores = lax.dot_general(
            q_h, k_h, (((1,), (1,)), ((), ())),
            preferred_element_type=jnp.float32)           # [tq, Sk] f32

        if has_mask:
            m_h = mask_ref[0, h if mask_per_head else 0]  # [tq, Sk] int8
            scores = jnp.where(m_h != 0, _NEG_INF, scores)
        if is_causal:
            scores = jnp.where(future, _NEG_INF, scores)

        # numerically stable softmax along the key axis.
        row_max = jnp.max(scores, axis=-1, keepdims=True)
        exps = jnp.exp((scores - row_max).astype(exp_dtype))   # bf16 EUP path
        exps_f32 = exps.astype(jnp.float32)
        denom = jnp.sum(exps_f32, axis=-1, keepdims=True)
        att = exps_f32 * pl.reciprocal(denom, approx=approx_recip)

        att_ref[0, h] = att.astype(att_ref.dtype)

        ctx_h = jnp.dot(att.astype(compute_dtype), v_h,
                        preferred_element_type=jnp.float32)    # [tq, hd]
        # store the head's context straight into its lane slice (no deferred
        # concatenate -> registers freed per head).
        out_ref[0, :, lo:lo + head_dim] = ctx_h.astype(out_ref.dtype)


def _choose_tq(Sq, Sk, d_model, num_heads, cdt_size, att_size,
               mask_row_bytes, budget):
    def step_bytes(tq):
        qkv = (tq + 2 * Sk) * d_model * cdt_size
        att = num_heads * tq * Sk * att_size
        msk = tq * mask_row_bytes
        ctx = tq * d_model * cdt_size
        transient = 4 * tq * Sk * 4 + tq * d_model * 4   # f32 temporaries
        return 2 * (qkv + att + msk + ctx) + transient

    # multiples of 32 keep the (sublane) tiling valid for f32/bf16/int8 blocks
    cands = sorted({c for c in (512, 256, 128, 64, 32) if Sq % c == 0} | {Sq},
                   reverse=True)
    for c in cands:
        if step_bytes(c) <= budget:
            return c
    return cands[-1]


def _attention(Qp, Kp, Vp, num_heads, mask, is_causal, compute_dtype,
               att_dtype):
    B, Sq, d_model = Qp.shape
    Sk = Kp.shape[1]
    hd = d_model // num_heads

    has_mask = mask is not None
    mask_arr = None
    mask_per_head = False
    mask_batched = False
    hm = 1
    if has_mask:
        m = jnp.asarray(mask)
        while m.ndim < 4:                       # left-pad like torch broadcast
            m = m[None]
        mask_per_head = (m.shape[1] != 1)
        mask_batched = (m.shape[0] != 1)
        hm = num_heads if mask_per_head else 1
        bm = B if mask_batched else 1
        # int8, NOT broadcast over batch -> no B-fold f32 copy in HBM.
        mask_arr = jnp.broadcast_to(m != 0, (bm, hm, Sq, Sk)).astype(jnp.int8)

    cdt_size = jnp.dtype(compute_dtype).itemsize
    att_size = jnp.dtype(att_dtype).itemsize
    tq = _choose_tq(Sq, Sk, d_model, num_heads, cdt_size, att_size,
                    hm * Sk if has_mask else 0, _vmem_tile_budget_bytes())
    grid = (B, Sq // tq)

    in_arrays = [Qp, Kp, Vp]
    in_specs = [
        pl.BlockSpec((1, tq, d_model), lambda b, qi: (b, qi, 0)),
        pl.BlockSpec((1, Sk, d_model), lambda b, qi: (b, 0, 0)),
        pl.BlockSpec((1, Sk, d_model), lambda b, qi: (b, 0, 0)),
    ]
    if has_mask:
        in_arrays.append(mask_arr)
        if mask_batched:
            in_specs.append(
                pl.BlockSpec((1, hm, tq, Sk), lambda b, qi: (b, 0, qi, 0)))
        else:
            in_specs.append(
                pl.BlockSpec((1, hm, tq, Sk), lambda b, qi: (0, 0, qi, 0)))

    is_f32 = jnp.dtype(compute_dtype) == jnp.dtype(jnp.float32)
    kernel = functools.partial(
        _mha_kernel, num_heads=num_heads, head_dim=hd,
        has_mask=has_mask, mask_per_head=mask_per_head, is_causal=is_causal,
        compute_dtype=compute_dtype,
        # bf16 exp feeds the EUP on v6e/v7x; f32 path stays exact.
        exp_dtype=jnp.float32 if is_f32 else jnp.bfloat16,
        approx_recip=not is_f32)

    att, ctx = pl.pallas_call(
        kernel,
        out_shape=(
            jax.ShapeDtypeStruct((B, num_heads, Sq, Sk), att_dtype),
            jax.ShapeDtypeStruct((B, Sq, d_model), compute_dtype),
        ),
        grid=grid,
        in_specs=in_specs,
        out_specs=(
            pl.BlockSpec((1, num_heads, tq, Sk), lambda b, qi: (b, 0, qi, 0)),
            pl.BlockSpec((1, tq, d_model), lambda b, qi: (b, qi, 0)),
        ),
        compiler_params=pltpu.CompilerParams(
            # batch axis across cores; q tiles stay local so the K/V block
            # (same index across qi) is not re-fetched per core.
            dimension_semantics=("parallel", "arbitrary"),
            vmem_limit_bytes=_vmem_limit_bytes()),
    )(*in_arrays)
    return att, ctx


# ----------------------------------------------------------------------------
# Full forward pass
# ----------------------------------------------------------------------------
def multi_head_attention_pallas(V, K, Q, params, num_heads, mask=None,
                                is_causal=False, compute_dtype=jnp.bfloat16,
                                att_dtype=None):
    """Forward pass identical to the PyTorch module.

    V, K, Q : [B, S, d_model] float32 (K/V may have a different seq length)
    params  : raw dict {'wq','wk','wv','wo'} in torch [out, in] layout, or a
              dict returned by prepare_params() (preferred: cached weight prep)
    mask    : optional, broadcastable to [B, num_heads, Sq, Sk]; nonzero==masked
    is_causal : generate the causal mask in-kernel (no mask DMA at all)
    Returns (output [B, Sq, d_model] f32,
             att_matrix [B, H, Sq, Sk] in att_dtype (default: compute dtype)).
    """
    prep = params if "wq_t" in params else prepare_params(
        params, num_heads, compute_dtype)
    cdt = prep["compute_dtype"]
    att_dtype = cdt if att_dtype is None else att_dtype

    B, Sq, d_model = Q.shape

    if (V is K) and (K is Q):
        # fused QKV projection: one pass over x, 3x wider N.
        y = linear(Q.reshape(B * Sq, d_model), prep["w_qkv_t"],
                   out_dtype=cdt, compute_dtype=cdt)
        Qp = y[:, 0 * d_model:1 * d_model].reshape(B, Sq, d_model)
        Kp = y[:, 1 * d_model:2 * d_model].reshape(B, Sq, d_model)
        Vp = y[:, 2 * d_model:3 * d_model].reshape(B, Sq, d_model)
    else:
        def project(x, w_t):
            b, s, _ = x.shape
            return linear(x.reshape(b * s, d_model), w_t,
                          out_dtype=cdt, compute_dtype=cdt).reshape(b, s, d_model)
        Vp = project(V, prep["wv_t"])
        Kp = project(K, prep["wk_t"])
        Qp = project(Q, prep["wq_t"])

    att, ctx = _attention(Qp, Kp, Vp, num_heads, mask, is_causal, cdt,
                          att_dtype)

    output = linear(ctx.reshape(B * Sq, d_model), prep["wo_t"],
                    out_dtype=jnp.float32, compute_dtype=cdt
                    ).reshape(B, Sq, d_model)
    return output, att


# ----------------------------------------------------------------------------
# Pure-JAX reference (mirrors the PyTorch forward) for sanity checking
# ----------------------------------------------------------------------------
def _reference(V, K, Q, params, num_heads, mask=None):
    B, Sq, d_model = Q.shape
    hd = d_model // num_heads

    def proj(x, w):
        return x @ w.T

    def split(x):
        return x.reshape(B, -1, num_heads, hd).transpose(0, 2, 1, 3)

    Vh = split(proj(V, params["wv"]))
    Kh = split(proj(K, params["wk"]))
    Qh = split(proj(Q, params["wq"]))
    att = jnp.einsum("bhqd,bhkd->bhqk", Qh, Kh) / math.sqrt(hd)
    if mask is not None:
        m = jnp.asarray(mask)
        while m.ndim < 4:
            m = m[None]
        att = jnp.where(jnp.broadcast_to(m, att.shape) > 0, -jnp.inf, att)
    att = jax.nn.softmax(att, axis=-1)
    out = jnp.einsum("bhqk,bhkd->bhqd", att, Vh)
    out = out.transpose(0, 2, 1, 3).reshape(B, Sq, d_model)
    return proj(out, params["wo"]), att


if __name__ == "__main__":
    B, S, d_model, num_heads = 2, 8, 32, 4

    key = jax.random.PRNGKey(0)
    kv, kk, kq, kwq, kwk, kwv, kwo = jax.random.split(key, 7)

    V = jax.random.normal(kv, (B, S, d_model), jnp.float32)
    K = jax.random.normal(kk, (B, S, d_model), jnp.float32)
    Q = jax.random.normal(kq, (B, S, d_model), jnp.float32)

    w_scale = 1.0 / math.sqrt(d_model)
    params = {
        "wq": jax.random.normal(kwq, (d_model, d_model), jnp.float32) * w_scale,
        "wk": jax.random.normal(kwk, (d_model, d_model), jnp.float32) * w_scale,
        "wv": jax.random.normal(kwv, (d_model, d_model), jnp.float32) * w_scale,
        "wo": jax.random.normal(kwo, (d_model, d_model), jnp.float32) * w_scale,
    }

    prep_bf = prepare_params(params, num_heads, compute_dtype=jnp.bfloat16)
    prep_f32 = prepare_params(params, num_heads, compute_dtype=jnp.float32)

    causal = jnp.triu(jnp.ones((S, S), jnp.float32), k=1)[None, None]  # 1==masked

    # --- run 1: default bf16 MXU path, no mask (no mask DMA at all) ---------
    out_bf, att_bf = multi_head_attention_pallas(V, K, Q, prep_bf, num_heads)
    jax.block_until_ready((out_bf, att_bf))
    ref_out, ref_att = _reference(V, K, Q, params, num_heads, mask=None)
    assert out_bf.shape == (B, S, d_model) and out_bf.dtype == jnp.float32
    assert att_bf.shape == (B, num_heads, S, S) and att_bf.dtype == jnp.bfloat16
    att_bf32 = att_bf.astype(jnp.float32)
    assert bool(jnp.all(jnp.isfinite(out_bf))) and bool(jnp.all(jnp.isfinite(att_bf32)))
    assert jnp.allclose(out_bf, ref_out, atol=1e-1, rtol=1e-1)
    assert jnp.allclose(att_bf32, ref_att, atol=5e-2, rtol=5e-2)

    # --- run 2: f32 MXU path, explicit causal mask array (int8 DMA path) ----
    out_f32, att_f32 = multi_head_attention_pallas(
        V, K, Q, prep_f32, num_heads, mask=causal)
    jax.block_until_ready((out_f32, att_f32))
    ref_out_m, ref_att_m = _reference(V, K, Q, params, num_heads, mask=causal)
    assert att_f32.dtype == jnp.float32
    assert bool(jnp.all(jnp.isfinite(out_f32))) and bool(jnp.all(jnp.isfinite(att_f32)))
    assert jnp.allclose(out_f32, ref_out_m, atol=2e-2, rtol=2e-2)
    assert jnp.allclose(att_f32, ref_att_m, atol=2e-2, rtol=2e-2)
    assert jnp.allclose(att_f32 * causal, 0.0, atol=1e-6)   # future positions ~0

    # --- run 3: self-attention -> fused QKV + in-kernel causal mask ---------
    out_c, att_c = multi_head_attention_pallas(
        Q, Q, Q, prep_bf, num_heads, is_causal=True)
    jax.block_until_ready((out_c, att_c))
    ref_out_c, ref_att_c = _reference(Q, Q, Q, params, num_heads, mask=causal)
    att_c32 = att_c.astype(jnp.float32)
    assert bool(jnp.all(jnp.isfinite(out_c))) and bool(jnp.all(jnp.isfinite(att_c32)))
    assert jnp.allclose(out_c, ref_out_c, atol=1e-1, rtol=1e-1)
    assert jnp.allclose(att_c32, ref_att_c, atol=5e-2, rtol=5e-2)
    assert jnp.allclose(att_c32 * causal[0, 0], 0.0, atol=1e-6)

    print("KERNEL_OK")
</pallas_src>

<mosaic_0001>
module attributes {stable_mosaic.version = 11 : i64} {
  func.func @_linear_kernel_single(%arg0: i32, %arg1: i32, %arg2: i32, %arg3: memref<16x32xf32, #tpu.memory_space<vmem>>, %arg4: memref<32x32xbf16, #tpu.memory_space<vmem>>, %arg5: memref<16x32xbf16, #tpu.memory_space<vmem>>) attributes {dimension_semantics = [#tpu.dimension_semantics<parallel>, #tpu.dimension_semantics<parallel>, #tpu.dimension_semantics<arbitrary>], iteration_bounds = array<i64: 1, 1, 1>, scalar_prefetch = 0 : i64, scratch_operands = 0 : i64, tpu.core_type = #tpu.core_type<tc>, window_params = [{transform_indices = @transform_0, window_bounds = array<i64: 16, 32>}, {transform_indices = @transform_1, window_bounds = array<i64: 32, 32>}, {transform_indices = @transform_2, window_bounds = array<i64: 16, 32>}]} {
    %c0 = arith.constant 0 : index
    %c0_0 = arith.constant 0 : index
    %0 = vector.load %arg3[%c0, %c0_0] : memref<16x32xf32, #tpu.memory_space<vmem>>, vector<16x32xf32>
    %1 = arith.truncf %0 : vector<16x32xf32> to vector<16x32xbf16>
    %c0_1 = arith.constant 0 : index
    %c0_2 = arith.constant 0 : index
    %2 = vector.load %arg4[%c0_1, %c0_2] : memref<32x32xbf16, #tpu.memory_space<vmem>>, vector<32x32xbf16>
    %cst = arith.constant dense<0.000000e+00> : vector<16x32xf32>
    %3 = tpu.matmul %1, %2, %cst {dimension_numbers = #tpu.dot_dimension_numbers<[1], [0], [0], [1], [0, 0, 1, 1], [], []>} : vector<16x32xbf16>, vector<32x32xbf16>, vector<16x32xf32> -> vector<16x32xf32>
    %4 = arith.truncf %3 : vector<16x32xf32> to vector<16x32xbf16>
    %c0_3 = arith.constant 0 : index
    %c0_4 = arith.constant 0 : index
    %5 = vector.load %arg5[%c0_3, %c0_4] : memref<16x32xbf16, #tpu.memory_space<vmem>>, vector<16x32xbf16>
    tpu.vector_store %arg5[%c0_3, %c0_4], %4 {strides = array<i32>} : memref<16x32xbf16, #tpu.memory_space<vmem>>, vector<16x32xbf16>,
    return
  }
  func.func @transform_0(%arg0: i32, %arg1: i32, %arg2: i32) -> (i32, i32) {
    %c0_i32 = arith.constant 0 : i32
    return %arg0, %arg2 : i32, i32
  }
  func.func @transform_1(%arg0: i32, %arg1: i32, %arg2: i32) -> (i32, i32) {
    %c0_i32 = arith.constant 0 : i32
    return %arg2, %arg1 : i32, i32
  }
  func.func @transform_2(%arg0: i32, %arg1: i32, %arg2: i32) -> (i32, i32) {
    %c0_i32 = arith.constant 0 : i32
    return %arg0, %arg1 : i32, i32
  }
}

</mosaic_0001>

<llo_original>
// kernel: tpu_custom_call.1
$region0: #{tpu_custom_call.1}
  #allocation0 [shape = 'u32[]', space=smem, size = 0x4, offset = 0x4, fixed_abs, tag = 'smem constant byte address 0x4 - core index']
  #allocation1 [shape = 'u32[144,128]{1,0:T(1,128)}', space=vmem, size = 0x12000, scoped, tag = 'internal scratch']
  %s0 = inlined_call_operand.hbm [shape: f32[16,32], index: 0, kind: input, shape index: {}]
  %s1 = inlined_call_operand.hbm [shape: bf16[32,32], index: 1, kind: input, shape index: {}]
  %s2 = inlined_call_operand.hbm [shape: bf16[16,32], index: 2, kind: output, shape index: {}]
  %s3 = sld [smem:[#allocation0]]
  $region26: #{tpu_custom_call.1} parent=0
    _
  %s5 = ssub.s32 1, %s3
  %s6 = scalar_select 0, %s5, %s3
  $region1: #{tpu_custom_call.1} parent=0
    #allocation2 [shape = 'u8[8192]{0}', space=vmem, size = 0x2000, scoped, tag = 'input window, operand 0, single buffered']
    #allocation3 [shape = 's32[1]{0}', space=sflag, size = 0x4, scoped, tag = 'scoped memory for tpu_custom_call.1']
    #allocation4 [shape = 's32[1]{0}', space=sflag, size = 0x4, scoped, tag = 'scoped memory for tpu_custom_call.1']
    #allocation5 [shape = 'u8[8192]{0}', space=vmem, size = 0x2000, scoped, tag = 'input window, operand 1, single buffered']
    #allocation6 [shape = 's32[1]{0}', space=sflag, size = 0x4, scoped, tag = 'scoped memory for tpu_custom_call.1']
    #allocation7 [shape = 'u8[4096]{0}', space=vmem, size = 0x1000, scoped, tag = 'output window, operand 0, single buffered']
    %7 = vsyncpa [#allocation3], 0
    %8 = vsyncpa [#allocation6], 0
    %9 = vsyncpa [#allocation4], 0
    // Predicated region
    $region2: #{tpu_custom_call.1} parent=1 // pred_check
      _
    $region3: #{tpu_custom_call.1} parent=1 // pred_check_branch
      %11 = sbr.rel (0) target = $region5
    $region4: #{tpu_custom_call.1} parent=1 // pred_region
      %s13 = ssub.s32 256, 256
      %14 = vsyncadd [#allocation3], %s13
      %s15 = sshll.u32 [#allocation2], 4
      %s16 = int_to_ptr.vmem [resolvable:$true] %s15
      %21 = dma.hbm_to_vmem [thread:$0]  %s0, 256, %s16, [#allocation3], 128, 128, 8
    $region5: #{tpu_custom_call.1} parent=1 // pred_fallthru
      _
    // Predicated region
    $region6: #{tpu_custom_call.1} parent=1 // pred_check
      _
    $region7: #{tpu_custom_call.1} parent=1 // pred_check_branch
      %23 = sbr.rel (0) target = $region9
    $region8: #{tpu_custom_call.1} parent=1 // pred_region
      %s25 = ssub.s32 256, 256
      %26 = vsyncadd [#allocation6], %s25
      %s27 = sshll.u32 [#allocation5], 4
      %s28 = int_to_ptr.vmem [resolvable:$true] %s27
      %33 = dma.hbm_to_vmem [thread:$0]  %s1, 256, %s28, [#allocation6], 64, 64, 4
    $region9: #{tpu_custom_call.1} parent=1 // pred_fallthru
      _
    // Predicated region
    $region10: #{tpu_custom_call.1} parent=1 // pred_check
      _
    $region11: #{tpu_custom_call.1} parent=1 // pred_check_branch
      %35 = sbr.rel (0) target = $region13
    $region12: #{tpu_custom_call.1} parent=1 // pred_region
      %36 = dma.done [#allocation3], 256
    $region13: #{tpu_custom_call.1} parent=1 // pred_fallthru
      _
    // Predicated region
    $region14: #{tpu_custom_call.1} parent=1 // pred_check
      _
    $region15: #{tpu_custom_call.1} parent=1 // pred_check_branch
      %38 = sbr.rel (0) target = $region17
    $region16: #{tpu_custom_call.1} parent=1 // pred_region
      %39 = dma.done [#allocation6], 256
    $region17: #{tpu_custom_call.1} parent=1 // pred_fallthru
      _
    %v41 = vld [vmem:[#allocation2] sm:$0xff]
    %v42 = vld [vmem:[#allocation2 + $0x8] sm:$0xff]
    %v43 = vpack.c.bf16 %v42, %v41
    %v44 = vld [vmem:[#allocation5] sm:$0xf]
    %v45 = vld [vmem:[#allocation5 + $0x4] sm:$0xf]
    %v46 = vld [vmem:[#allocation5 + $0x8] sm:$0xf]
    %v47 = vld [vmem:[#allocation5 + $0xc] sm:$0xf]
    %v52 = vunpack.c.l.b16 %v44
    %v53 = vunpack.c.l.b16 %v45
    %v54 = vunpack.c.l.b16 %v46
    %v55 = vunpack.c.l.b16 %v47
    %v56 = vpack.c.b16 %v53, %v52
    %v57 = vpack.c.b16 %v55, %v54
    %vm60 = vcmask 261120
    %v62 = vsel %vm60, %v43, 0
    %64 = vmatprep.subr.bf16.mxu0 0
    %65 = vmatpush1.bf16.msra.mxu0 %v56
    %66 = vmatprep.subr.bf16.mxu0 0
    %67 = vmatpush1.bf16.msra.mxu0 %v57
    %68 = vmatprep.subr.bf16.mxu0 0
    %69 = vmatpush1.bf16.msra.mxu0 0
    %70 = vmatprep.subr.bf16.mxu0 0
    %71 = vmatpush1.bf16.msra.mxu0 0
    %72 = vmatprep.subr.bf16.mxu0 0
    %73 = vmatpush1.bf16.msra.mxu0 0
    %74 = vmatprep.subr.bf16.mxu0 0
    %75 = vmatpush1.bf16.msra.mxu0 0
    %76 = vmatprep.subr.bf16.mxu0 0
    %77 = vmatpush1.bf16.msra.mxu0 0
    %78 = vmatprep.subr.bf16.mxu0 0
    %79 = vmatpush1.bf16.msra.mxu0 0
    %80 = vmatprep.subr.bf16.mxu0 0
    %81 = vmatpush1.bf16.msra.mxu0 0
    %82 = vmatprep.subr.bf16.mxu0 0
    %83 = vmatpush1.bf16.msra.mxu0 0
    %84 = vmatprep.subr.bf16.mxu0 0
    %85 = vmatpush1.bf16.msra.mxu0 0
    %86 = vmatprep.subr.bf16.mxu0 0
    %87 = vmatpush1.bf16.msra.mxu0 0
    %88 = vmatprep.subr.bf16.mxu0 0
    %89 = vmatpush1.bf16.msra.mxu0 0
    %90 = vmatprep.subr.bf16.mxu0 0
    %91 = vmatpush1.bf16.msra.mxu0 0
    %92 = vmatprep.subr.bf16.mxu0 0
    %93 = vmatpush1.bf16.msra.mxu0 0
    %94 = vmatprep.subr.bf16.mxu0 0
    %95 = vmatpush1.bf16.msra.mxu0 0
    %96 = vmatprep.mubr.bf16.mxu0 0
    %97 = vmatmul.mubr.bf16.gmra.mrb[0].mxu0 %v62
    %v98 = vpop.f32.mrb[0].mxu0
    %v99 = vadd.f32 0.0, %v98
    %v100 = vpop.f32.mrb[0].mxu0
    %v101 = vpop.f32.mrb[0].mxu0
    %v102 = vadd.f32 0.0, %v101
    %v103 = vpop.f32.mrb[0].mxu0
    %104 = vdwg.mxu0
    %v105 = vpack.c.bf16 %v102, %v99
    %v107 = vunpack.c.l.b16 %v105
    %v108 = vunpack.c.h.b16 %v105
    %v109 = vpack.c.b16 %v107, %v107
    %v110 = vpack.c.b16 %v108, %v108
    %vm113 = vcmask 257024
    %114 = vst.msk [vmem:[#allocation7] sm:$0xf] %vm113, %v109
    %115 = vst.msk [vmem:[#allocation7 + $0x4] sm:$0xf] %vm113, %v110
    // Predicated region
    $region18: #{tpu_custom_call.1} parent=1 // pred_check
      _
    $region19: #{tpu_custom_call.1} parent=1 // pred_check_branch
      %117 = sbr.rel (0) target = $region21
    $region20: #{tpu_custom_call.1} parent=1 // pred_region
      %s119 = ssub.s32 128, 128
      %120 = vsyncadd [#allocation4], %s119
      %s121 = sshll.u32 [#allocation7], 4
      %s122 = int_to_ptr.vmem [resolvable:$true] %s121
      %127 = dma.vmem_to_hbm [thread:$0]  %s122, 128, %s2, [#allocation4], 64, 64, 4
    $region21: #{tpu_custom_call.1} parent=1 // pred_fallthru
      _
    // Predicated region
    $region22: #{tpu_custom_call.1} parent=1 // pred_check
      _
    $region23: #{tpu_custom_call.1} parent=1 // pred_check_branch
      %129 = sbr.rel (0) target = $region25
    $region24: #{tpu_custom_call.1} parent=1 // pred_region
      %130 = dma.done [#allocation4], 128
    $region25: #{tpu_custom_call.1} parent=1 // pred_fallthru
      _
    %131 = vsyncpa [#allocation3], 1
    %132 = vsyncpa [#allocation6], 1
    %133 = vsyncpa [#allocation4], 1

</llo_original>
